<compile_context>
chip_gen: v5e
topology: v5e:2x2
jax: 0.10.0
libtpu: 0.0.40
codegen_flags: <defaults>
</compile_context>

<pallas_src>
import jax
import jax.numpy as jnp
from jax.experimental import pallas as pl
from jax.experimental.pallas import tpu as pltpu

ALPHABET = 12            # input_size / output_size
HIDDEN = 50              # hidden_size
N_LAYERS = 1             # (the script passes batch_size=1 as n_layers)
BATCH = 1                # forward requires batch==1 for the h2o view(1, -1)

HP = 128                 # lane-padded hidden width
OP = 128                 # lane-padded output width
BIAS_LANE = HP - 1       # padded input lane that carries a constant 1.0
SLAB_ROWS = 3 * HP + 8   # [W_ih^T ; W_hh^T] (2*HP) + W_ho^T (HP) + b_o row (8-row pad)
NEG_INF = -1e30          # softmax mask value for padded logit lanes


def _char_rnn_seq_kernel(slab_ref, h0_ref, xs_ref, out_ref, hT_ref, xh_sc):
    """One RNN step per grid iteration; packed weights stay resident in VMEM."""
    t = pl.program_id(0)

    @pl.when(t == 0)
    def _init():
        # seed the recurrent half of the [x | h] scratch with h0
        xh_sc[:, HP:] = h0_ref[...]

    # stream this step's (already padded, bias-lane == 1) input into the scratch
    xh_sc[:, :HP] = xs_ref[0]

    # fused RNN cell: single MXU dot; (b_ih + b_hh) rides in via the bias lane
    w_cat = slab_ref[pl.ds(0, 2 * HP), :]                           # (2*HP, HP)
    h_new = jnp.tanh(jnp.dot(xh_sc[...], w_cat,
                             preferred_element_type=jnp.float32))   # (1, HP)

    # h2o linear; padded logit lanes receive -1e30 from the packed bias row
    w_ho = slab_ref[pl.ds(2 * HP, HP), :]                           # (HP, OP)
    b_o = slab_ref[pl.ds(3 * HP, 1), :]                             # (1, OP)
    logits = jnp.dot(h_new, w_ho, preferred_element_type=jnp.float32) + b_o

    # softmax over lanes (padded lanes contribute exp(-1e30) == 0)
    m = jnp.max(logits, axis=-1, keepdims=True)
    e = jnp.exp(logits - m)
    inv = pl.reciprocal(jnp.sum(e, axis=-1, keepdims=True), approx=False)
    out_ref[0] = e * inv

    # carry the hidden state; keep the (resident) final-hidden output current
    xh_sc[:, HP:] = h_new
    hT_ref[...] = h_new


def pack_params(params):
    """Pack all CharRNN parameters into one lane-dense fp32 slab (done once)."""
    w_ih, w_hh, b_ih, b_hh, w_ho, b_ho = params
    slab = jnp.zeros((SLAB_ROWS, HP), jnp.float32)
    # rows [0, 2*HP): fused [W_ih^T ; W_hh^T]; summed RNN bias sits on the bias lane
    slab = slab.at[:HIDDEN, :HIDDEN].set(w_ih.T)
    slab = slab.at[BIAS_LANE, :HIDDEN].set(b_ih + b_hh)
    slab = slab.at[HP:HP + HIDDEN, :HIDDEN].set(w_hh.T)
    # rows [2*HP, 3*HP): W_ho^T
    slab = slab.at[2 * HP:2 * HP + HIDDEN, :ALPHABET].set(w_ho.T)
    # row 3*HP: output bias; padded lanes masked with -1e30 for the softmax
    b_row = jnp.full((OP,), NEG_INF, jnp.float32).at[:ALPHABET].set(b_ho)
    slab = slab.at[3 * HP, :].set(b_row)
    return slab


def char_rnn_seq_forward(xs, hidden, slab):
    """Run T RNN steps in a single pallas_call.

    xs:     (T, HIDDEN) float32 per-step inputs
    hidden: (N_LAYERS, BATCH, HIDDEN) float32 initial hidden state
    slab:   packed parameters from pack_params()
    Returns (probs (T, ALPHABET), hidden (N_LAYERS, BATCH, HIDDEN)).
    """
    T = xs.shape[0]
    # lane-pad inputs; bias lane carries a constant 1.0 (folds b_ih+b_hh into the dot)
    xs_p = jnp.zeros((T, 1, HP), jnp.float32)
    xs_p = xs_p.at[:, 0, :HIDDEN].set(xs).at[:, 0, BIAS_LANE].set(1.0)
    # hidden.reshape assumes N_LAYERS == 1, exactly as the PyTorch h2o view does
    h0_p = jnp.zeros((BATCH, HP), jnp.float32).at[:, :HIDDEN].set(
        hidden.reshape(BATCH, HIDDEN))

    out_p, hT_p = pl.pallas_call(
        _char_rnn_seq_kernel,
        out_shape=(
            jax.ShapeDtypeStruct((T, 1, OP), jnp.float32),
            jax.ShapeDtypeStruct((BATCH, HP), jnp.float32),
        ),
        grid_spec=pltpu.PrefetchScalarGridSpec(
            num_scalar_prefetch=0,
            grid=(T,),
            in_specs=[
                pl.BlockSpec((SLAB_ROWS, HP), lambda t: (0, 0)),   # packed params: resident
                pl.BlockSpec((BATCH, HP), lambda t: (0, 0)),       # h0: resident
                pl.BlockSpec((1, 1, HP), lambda t: (t, 0, 0)),     # x_t: streamed
            ],
            out_specs=(
                pl.BlockSpec((1, 1, OP), lambda t: (t, 0, 0)),     # per-step probs
                pl.BlockSpec((BATCH, HP), lambda t: (0, 0)),       # final hidden: resident
            ),
            scratch_shapes=[pltpu.VMEM((1, 2 * HP), jnp.float32)],  # [x | h] carry
        ),
        compiler_params=pltpu.CompilerParams(
            dimension_semantics=("arbitrary",)),
        # final hidden state aliases the (padded) initial-hidden buffer
        input_output_aliases={1: 1},
    )(slab, h0_p, xs_p)

    probs = out_p[:, 0, :ALPHABET]
    h_new = hT_p[:, :HIDDEN].reshape(N_LAYERS, BATCH, HIDDEN)
    return probs, h_new


def char_rnn_forward(x, hidden, slab):
    """Single-step forward matching CharRNN.forward (x: (1, HIDDEN))."""
    probs, h_new = char_rnn_seq_forward(x, hidden, slab)
    return probs, h_new


def init_params(key):
    """Deterministic param init mimicking PyTorch's uniform(-1/sqrt(H), 1/sqrt(H))."""
    k = jax.random.split(key, 6)
    bound = 1.0 / jnp.sqrt(jnp.float32(HIDDEN))
    u = lambda kk, shape: jax.random.uniform(
        kk, shape, jnp.float32, minval=-bound, maxval=bound)
    w_ih = u(k[0], (HIDDEN, HIDDEN))     # RNN weight_ih_l0
    w_hh = u(k[1], (HIDDEN, HIDDEN))     # RNN weight_hh_l0
    b_ih = u(k[2], (HIDDEN,))
    b_hh = u(k[3], (HIDDEN,))
    w_ho = u(k[4], (ALPHABET, HIDDEN))   # h2o.weight
    b_ho = u(k[5], (ALPHABET,))          # h2o.bias
    return (w_ih, w_hh, b_ih, b_hh, w_ho, b_ho)


def reference_forward(x, hidden, params):
    """Pure-JAX reference of the PyTorch forward for validation."""
    w_ih, w_hh, b_ih, b_hh, w_ho, b_ho = params
    h0 = hidden.reshape(BATCH, HIDDEN)
    h_new = jnp.tanh(x @ w_ih.T + b_ih + h0 @ w_hh.T + b_hh)
    logits = h_new @ w_ho.T + b_ho
    out1 = jax.nn.softmax(logits, axis=-1)
    return out1, h_new.reshape(N_LAYERS, BATCH, HIDDEN)


def reference_seq(xs, hidden, params):
    """Scan the single-step reference over a sequence."""
    def step(h, x_t):
        out_t, h_new = reference_forward(x_t[None, :], h, params)
        return h_new, out_t[0]
    hT, outs = jax.lax.scan(step, hidden, xs)
    return outs, hT


if __name__ == "__main__":
    key = jax.random.PRNGKey(0)
    k_param, k_x, k_seq = jax.random.split(key, 3)

    params = init_params(k_param)
    slab = pack_params(params)           # one-time packing -> single weight DMA per call

    # --- single step: exact CharRNN.forward semantics ---
    x = jax.random.normal(k_x, (BATCH, HIDDEN), dtype=jnp.float32)
    hidden0 = jnp.zeros((N_LAYERS, BATCH, HIDDEN), dtype=jnp.float32)   # init_hidden

    out1, hidden1 = char_rnn_forward(x, hidden0, slab)
    out1 = jax.block_until_ready(out1)
    hidden1 = jax.block_until_ready(hidden1)

    ref_out, ref_hidden = reference_forward(x, hidden0, params)
    assert out1.shape == (BATCH, ALPHABET)
    assert hidden1.shape == (N_LAYERS, BATCH, HIDDEN)
    assert jnp.allclose(out1, ref_out, atol=1e-5, rtol=1e-5)
    assert jnp.allclose(hidden1, ref_hidden, atol=1e-5, rtol=1e-5)

    # --- amortized sequence mode: T steps in one pallas_call (same per-step math) ---
    T = 16
    xs = jax.random.normal(k_seq, (T, HIDDEN), dtype=jnp.float32)
    outs, hiddenT = char_rnn_seq_forward(xs, hidden0, slab)
    outs = jax.block_until_ready(outs)
    hiddenT = jax.block_until_ready(hiddenT)

    ref_outs, ref_hiddenT = reference_seq(xs, hidden0, params)
    assert outs.shape == (T, ALPHABET)
    assert hiddenT.shape == (N_LAYERS, BATCH, HIDDEN)
    assert jnp.allclose(outs, ref_outs, atol=1e-4, rtol=1e-4)
    assert jnp.allclose(hiddenT, ref_hiddenT, atol=1e-4, rtol=1e-4)

    print("KERNEL_OK")
</pallas_src>

<mosaic_0001>
module attributes {stable_mosaic.version = 11 : i64} {
  func.func @_char_rnn_seq_kernel(%arg0: i32, %arg1: memref<392x128xf32, #tpu.memory_space<vmem>>, %arg2: memref<1x128xf32, #tpu.memory_space<vmem>>, %arg3: memref<1x1x128xf32, #tpu.memory_space<vmem>>, %arg4: memref<1x1x128xf32, #tpu.memory_space<vmem>>, %arg5: memref<1x128xf32, #tpu.memory_space<vmem>>, %arg6: memref<1x256xf32, #tpu.memory_space<vmem>>) attributes {dimension_semantics = [#tpu.dimension_semantics<arbitrary>], iteration_bounds = array<i64: 1>, scalar_prefetch = 0 : i64, scratch_operands = 1 : i64, tpu.core_type = #tpu.core_type<tc>, window_params = [{pipeline_mode = #tpu.pipeline_mode<synchronous>, transform_indices = @transform_0, window_bounds = array<i64: 392, 128>}, {pipeline_mode = #tpu.pipeline_mode<synchronous>, transform_indices = @transform_1, window_bounds = array<i64: 1, 128>}, {transform_indices = @transform_2, window_bounds = array<i64: 1, 1, 128>}, {transform_indices = @transform_3, window_bounds = array<i64: 1, 1, 128>}, {pipeline_mode = #tpu.pipeline_mode<synchronous>, transform_indices = @transform_4, window_bounds = array<i64: 1, 128>}]} {
    %c0_i32 = arith.constant 0 : i32
    %0 = arith.cmpi eq, %arg0, %c0_i32 : i32
    %1 = arith.extui %0 : i1 to i32
    %c0_i32_0 = arith.constant 0 : i32
    %2 = arith.cmpi ne, %1, %c0_i32_0 : i32
    scf.if %2 {
      %c0_20 = arith.constant 0 : index
      %c0_21 = arith.constant 0 : index
      %29 = vector.load %arg2[%c0_20, %c0_21] : memref<1x128xf32, #tpu.memory_space<vmem>>, vector<1x128xf32>
      %c0_22 = arith.constant 0 : index
      %c128_23 = arith.constant 128 : index
      %30 = vector.load %arg6[%c0_22, %c128_23] : memref<1x256xf32, #tpu.memory_space<vmem>>, vector<1x128xf32>
      tpu.vector_store %arg6[%c0_22, %c128_23], %29 {strides = array<i32>} : memref<1x256xf32, #tpu.memory_space<vmem>>, vector<1x128xf32>,
    } else {
    }
    %c0 = arith.constant 0 : index
    %c0_1 = arith.constant 0 : index
    %c0_2 = arith.constant 0 : index
    %3 = vector.load %arg3[%c0, %c0_1, %c0_2] : memref<1x1x128xf32, #tpu.memory_space<vmem>>, vector<1x1x128xf32>
    %4 = vector.shape_cast %3 : vector<1x1x128xf32> to vector<1x128xf32>
    %c0_3 = arith.constant 0 : index
    %c0_4 = arith.constant 0 : index
    %5 = vector.load %arg6[%c0_3, %c0_4] : memref<1x256xf32, #tpu.memory_space<vmem>>, vector<1x128xf32>
    tpu.vector_store %arg6[%c0_3, %c0_4], %4 {strides = array<i32>} : memref<1x256xf32, #tpu.memory_space<vmem>>, vector<1x128xf32>,
    %c0_5 = arith.constant 0 : index
    %c0_6 = arith.constant 0 : index
    %6 = vector.load %arg1[%c0_5, %c0_6] : memref<392x128xf32, #tpu.memory_space<vmem>>, vector<256x128xf32>
    %c0_7 = arith.constant 0 : index
    %c0_8 = arith.constant 0 : index
    %7 = vector.load %arg6[%c0_7, %c0_8] : memref<1x256xf32, #tpu.memory_space<vmem>>, vector<1x256xf32>
    %cst = arith.constant dense<0.000000e+00> : vector<1x128xf32>
    %8 = tpu.matmul %7, %6, %cst {dimension_numbers = #tpu.dot_dimension_numbers<[1], [0], [0], [1], [0, 0, 1, 1], [], []>} : vector<1x256xf32>, vector<256x128xf32>, vector<1x128xf32> -> vector<1x128xf32>
    %9 = math.tanh %8 : vector<1x128xf32>
    %c256 = arith.constant 256 : index
    %c0_9 = arith.constant 0 : index
    %10 = vector.load %arg1[%c256, %c0_9] : memref<392x128xf32, #tpu.memory_space<vmem>>, vector<128x128xf32>
    %c384 = arith.constant 384 : index
    %c0_10 = arith.constant 0 : index
    %11 = vector.load %arg1[%c384, %c0_10] : memref<392x128xf32, #tpu.memory_space<vmem>>, vector<1x128xf32>
    %cst_11 = arith.constant dense<0.000000e+00> : vector<1x128xf32>
    %12 = tpu.matmul %9, %10, %cst_11 {dimension_numbers = #tpu.dot_dimension_numbers<[1], [0], [0], [1], [0, 0, 1, 1], [], []>} : vector<1x128xf32>, vector<128x128xf32>, vector<1x128xf32> -> vector<1x128xf32>
    %13 = arith.addf %12, %11 : vector<1x128xf32>
    %cst_12 = arith.constant dense<0xFF800000> : vector<1xf32>
    %14 = vector.multi_reduction <maximumf>, %13, %cst_12 [1] : vector<1x128xf32> to vector<1xf32>
    %15 = vector.shape_cast %14 : vector<1xf32> to vector<1x1xf32>
    %16 = vector.broadcast %15 : vector<1x1xf32> to vector<1x128xf32>
    %17 = arith.subf %13, %16 : vector<1x128xf32>
    %18 = math.exp %17 : vector<1x128xf32>
    %cst_13 = arith.constant dense<0.000000e+00> : vector<1xf32>
    %19 = vector.multi_reduction <add>, %18, %cst_13 [1] : vector<1x128xf32> to vector<1xf32>
    %20 = vector.shape_cast %19 : vector<1xf32> to vector<1x1xf32>
    %21 = tpu.reciprocal %20 : vector<1x1xf32> -> vector<1x1xf32>
    %22 = vector.broadcast %21 : vector<1x1xf32> to vector<1x128xf32>
    %23 = arith.mulf %18, %22 : vector<1x128xf32>
    %c0_14 = arith.constant 0 : index
    %c0_15 = arith.constant 0 : index
    %c0_16 = arith.constant 0 : index
    %24 = vector.load %arg4[%c0_14, %c0_15, %c0_16] : memref<1x1x128xf32, #tpu.memory_space<vmem>>, vector<1x1x128xf32>
    %25 = vector.shape_cast %24 : vector<1x1x128xf32> to vector<1x128xf32>
    %26 = vector.shape_cast %23 : vector<1x128xf32> to vector<1x1x128xf32>
    tpu.vector_store %arg4[%c0_14, %c0_15, %c0_16], %26 {strides = array<i32>} : memref<1x1x128xf32, #tpu.memory_space<vmem>>, vector<1x1x128xf32>,
    %c0_17 = arith.constant 0 : index
    %c128 = arith.constant 128 : index
    %27 = vector.load %arg6[%c0_17, %c128] : memref<1x256xf32, #tpu.memory_space<vmem>>, vector<1x128xf32>
    tpu.vector_store %arg6[%c0_17, %c128], %9 {strides = array<i32>} : memref<1x256xf32, #tpu.memory_space<vmem>>, vector<1x128xf32>,
    %c0_18 = arith.constant 0 : index
    %c0_19 = arith.constant 0 : index
    %28 = vector.load %arg5[%c0_18, %c0_19] : memref<1x128xf32, #tpu.memory_space<vmem>>, vector<1x128xf32>
    tpu.vector_store %arg5[%c0_18, %c0_19], %9 {strides = array<i32>} : memref<1x128xf32, #tpu.memory_space<vmem>>, vector<1x128xf32>,
    return
  }
  func.func @transform_0(%arg0: i32) -> (i32, i32) {
    %c0_i32 = arith.constant 0 : i32
    %c0_i32_0 = arith.constant 0 : i32
    %c0_i32_1 = arith.constant 0 : i32
    return %c0_i32, %c0_i32_0 : i32, i32
  }
  func.func @transform_1(%arg0: i32) -> (i32, i32) {
    %c0_i32 = arith.constant 0 : i32
    %c0_i32_0 = arith.constant 0 : i32
    %c0_i32_1 = arith.constant 0 : i32
    return %c0_i32, %c0_i32_0 : i32, i32
  }
  func.func @transform_2(%arg0: i32) -> (i32, i32, i32) {
    %c0_i32 = arith.constant 0 : i32
    %c0_i32_0 = arith.constant 0 : i32
    %c0_i32_1 = arith.constant 0 : i32
    return %arg0, %c0_i32, %c0_i32_0 : i32, i32, i32
  }
  func.func @transform_3(%arg0: i32) -> (i32, i32, i32) {
    %c0_i32 = arith.constant 0 : i32
    %c0_i32_0 = arith.constant 0 : i32
    %c0_i32_1 = arith.constant 0 : i32
    return %arg0, %c0_i32, %c0_i32_0 : i32, i32, i32
  }
  func.func @transform_4(%arg0: i32) -> (i32, i32) {
    %c0_i32 = arith.constant 0 : i32
    %c0_i32_0 = arith.constant 0 : i32
    %c0_i32_1 = arith.constant 0 : i32
    return %c0_i32, %c0_i32_0 : i32, i32
  }
}

</mosaic_0001>

<llo_original>
// kernel: tpu_custom_call.1
$region0: #{tpu_custom_call.1}
  #allocation0 [shape = 'u32[]', space=smem, size = 0x4, offset = 0x4, fixed_abs, tag = 'smem constant byte address 0x4 - core index']
  #allocation1 [shape = 'u32[72,128]{1,0:T(1,128)}', space=vmem, size = 0x9000, scoped, tag = 'internal scratch']
  #allocation2 [shape = 'f32[1,256]{1,0:T(1,128)}', space=vmem, size = 0x400, scoped, tag = 'scratch operand']
  %s0 = inlined_call_operand.hbm [shape: f32[392,128], index: 0, kind: input, shape index: {}]
  %s1 = inlined_call_operand.hbm [shape: f32[1,128], index: 1, kind: input, shape index: {}, may-alias: {1,4}]
  %s2 = inlined_call_operand.vmem [shape: f32[1,1,128], index: 2, kind: input, shape index: {}]
  %s3 = inlined_call_operand.hbm [shape: f32[1,1,128], index: 3, kind: output, shape index: {0}]
  %s4 = inlined_call_operand.hbm [shape: f32[1,128], index: 4, kind: output, shape index: {1}, may-alias: {1,4}]
  %5 = xla_tuple %s3, %s4
  %s6 = sld [smem:[#allocation0]]
  $region42: #{tpu_custom_call.1} parent=0
    _
  %s8 = ssub.s32 1, %s6
  %s9 = scalar_select 0, %s8, %s6
  $region1: #{tpu_custom_call.1} parent=0
    #allocation3 [shape = 'u8[200704]{0}', space=vmem, size = 0x31000, scoped, tag = 'input window, operand 0, single buffered']
    #allocation4 [shape = 's32[1]{0}', space=sflag, size = 0x4, scoped, tag = 'scoped memory for tpu_custom_call.1']
    #allocation5 [shape = 's32[1]{0}', space=sflag, size = 0x4, scoped, tag = 'scoped memory for tpu_custom_call.1']
    #allocation6 [shape = 'u8[512]{0}', space=vmem, size = 0x400, scoped, tag = 'input window, operand 1, single buffered']
    #allocation7 [shape = 's32[1]{0}', space=sflag, size = 0x4, scoped, tag = 'scoped memory for tpu_custom_call.1']
    #allocation8 [shape = 'u8[512]{0}', space=vmem, size = 0x400, scoped, tag = 'output window, operand 0, single buffered']
    #allocation9 [shape = 'u8[512]{0}', space=vmem, size = 0x400, scoped, tag = 'output window, operand 1, single buffered']
    #allocation10 [shape = 's32[1]{0}', space=sflag, size = 0x4, scoped, tag = 'scoped memory for tpu_custom_call.1']
    %10 = vsyncpa [#allocation4], 0
    %11 = vsyncpa [#allocation7], 0
    %12 = vsyncpa [#allocation5], 0
    %13 = vsyncpa [#allocation10], 0
    // Predicated region
    $region2: #{tpu_custom_call.1} parent=1 // pred_check
      _
    $region3: #{tpu_custom_call.1} parent=1 // pred_check_branch
      %15 = sbr.rel (0) target = $region5
    $region4: #{tpu_custom_call.1} parent=1 // pred_region
      %17 = vsyncadd [#allocation4], 0
      %s18 = sshll.u32 %s0, 4
      %s19 = int_to_ptr.hbm [resolvable:$true] %s18
      %s20 = sshll.u32 [#allocation3], 4
      %s21 = int_to_ptr.vmem [resolvable:$true] %s20
      %26 = dma.hbm_to_vmem [thread:$0]  %s19, 6272, %s21, [#allocation4], 128, 128, 8
    $region5: #{tpu_custom_call.1} parent=1 // pred_fallthru
      _
    // Predicated region
    $region6: #{tpu_custom_call.1} parent=1 // pred_check
      _
    $region7: #{tpu_custom_call.1} parent=1 // pred_check_branch
      %28 = sbr.rel (0) target = $region9
    $region8: #{tpu_custom_call.1} parent=1 // pred_region
      %30 = vsyncadd [#allocation7], 0
      %s32 = sshll.u32 %s1, 4
      %s33 = int_to_ptr.hbm [resolvable:$true] %s32
      %s34 = sshll.u32 [#allocation6], 4
      %s35 = int_to_ptr.vmem [resolvable:$true] %s34
      %37 = dma.hbm_to_vmem [thread:$0]  %s33, 16, %s35, [#allocation7]
    $region9: #{tpu_custom_call.1} parent=1 // pred_fallthru
      _
    // Predicated region
    $region10: #{tpu_custom_call.1} parent=1 // pred_check
      _
    $region11: #{tpu_custom_call.1} parent=1 // pred_check_branch
      %39 = sbr.rel (0) target = $region13
    $region12: #{tpu_custom_call.1} parent=1 // pred_region
      _
    $region13: #{tpu_custom_call.1} parent=1 // pred_fallthru
      _
    // Predicated region
    $region14: #{tpu_custom_call.1} parent=1 // pred_check
      _
    $region15: #{tpu_custom_call.1} parent=1 // pred_check_branch
      %41 = sbr.rel (0) target = $region17
    $region16: #{tpu_custom_call.1} parent=1 // pred_region
      %43 = dma.done [#allocation4], 6272
    $region17: #{tpu_custom_call.1} parent=1 // pred_fallthru
      _
    // Predicated region
    $region18: #{tpu_custom_call.1} parent=1 // pred_check
      _
    $region19: #{tpu_custom_call.1} parent=1 // pred_check_branch
      %45 = sbr.rel (0) target = $region21
    $region20: #{tpu_custom_call.1} parent=1 // pred_region
      %47 = dma.done [#allocation7], 16
    $region21: #{tpu_custom_call.1} parent=1 // pred_fallthru
      _
    %p48 = scmp.eq.s32.totalorder 0, 0
    // Predicated region
    $region22: #{tpu_custom_call.1} parent=1 // pred_check
      %p49 = pneg %p48
    $region23: #{tpu_custom_call.1} parent=1 // pred_check_branch
      %51 = sbr.rel (%p49) target = $region25
    $region24: #{tpu_custom_call.1} parent=1 // pred_region
      %v52 = vld [vmem:[#allocation6] sm:$0x1]
      %v53 = vlaneseq
      %vm54 = vcmp.ge.s32.totalorder %v53, 0
      %vm55 = vcmp.lt.s32.totalorder %v53, 128
      %vm56 = vmand %vm54, %vm55
      %57 = vst.msk [vmem:[#allocation2 + $0x1] sm:$0x1] %vm56, %v52
    $region25: #{tpu_custom_call.1} parent=1 // pred_fallthru
      _
    %v58 = vld [vmem:[%s2] sm:$0x1]
    %v59 = vlaneseq
    %vm60 = vcmp.ge.s32.totalorder %v59, 0
    %vm61 = vcmp.lt.s32.totalorder %v59, 128
    %vm62 = vmand %vm60, %vm61
    %63 = vst.msk [vmem:[#allocation2] sm:$0x1] %vm62, %v58
    %v64 = vld [vmem:[#allocation3] sm:$0xff]
    %v65 = vld [vmem:[#allocation3 + $0x8] sm:$0xff]
    %v66 = vld [vmem:[#allocation3 + $0x10] sm:$0xff]
    %v67 = vld [vmem:[#allocation3 + $0x18] sm:$0xff]
    %v68 = vld [vmem:[#allocation3 + $0x20] sm:$0xff]
    %v69 = vld [vmem:[#allocation3 + $0x28] sm:$0xff]
    %v70 = vld [vmem:[#allocation3 + $0x30] sm:$0xff]
    %v71 = vld [vmem:[#allocation3 + $0x38] sm:$0xff]
    %v72 = vld [vmem:[#allocation3 + $0x40] sm:$0xff]
    %v73 = vld [vmem:[#allocation3 + $0x48] sm:$0xff]
    %v74 = vld [vmem:[#allocation3 + $0x50] sm:$0xff]
    %v75 = vld [vmem:[#allocation3 + $0x58] sm:$0xff]
    %v76 = vld [vmem:[#allocation3 + $0x60] sm:$0xff]
    %v77 = vld [vmem:[#allocation3 + $0x68] sm:$0xff]
    %v78 = vld [vmem:[#allocation3 + $0x70] sm:$0xff]
    %v79 = vld [vmem:[#allocation3 + $0x78] sm:$0xff]
    %v80 = vld [vmem:[#allocation3 + $0x80] sm:$0xff]
    %v81 = vld [vmem:[#allocation3 + $0x88] sm:$0xff]
    %v82 = vld [vmem:[#allocation3 + $0x90] sm:$0xff]
    %v83 = vld [vmem:[#allocation3 + $0x98] sm:$0xff]
    %v84 = vld [vmem:[#allocation3 + $0xa0] sm:$0xff]
    %v85 = vld [vmem:[#allocation3 + $0xa8] sm:$0xff]
    %v86 = vld [vmem:[#allocation3 + $0xb0] sm:$0xff]
    %v87 = vld [vmem:[#allocation3 + $0xb8] sm:$0xff]
    %v88 = vld [vmem:[#allocation3 + $0xc0] sm:$0xff]
    %v89 = vld [vmem:[#allocation3 + $0xc8] sm:$0xff]
    %v90 = vld [vmem:[#allocation3 + $0xd0] sm:$0xff]
    %v91 = vld [vmem:[#allocation3 + $0xd8] sm:$0xff]
    %v92 = vld [vmem:[#allocation3 + $0xe0] sm:$0xff]
    %v93 = vld [vmem:[#allocation3 + $0xe8] sm:$0xff]
    %v94 = vld [vmem:[#allocation3 + $0xf0] sm:$0xff]
    %v95 = vld [vmem:[#allocation3 + $0xf8] sm:$0xff]
    %v96 = vld [vmem:[#allocation2] sm:$0x3]
    %v98 = vperm.slane %v96, 0
    %v99 = vperm.slane %v96, 1
    %102 = vmatpush.msra.mxu0 %v79
    %103 = vmatpush.msra.mxu0 %v78
    %104 = vmatpush.msra.mxu0 %v77
    %105 = vmatpush.msra.mxu0 %v76
    %106 = vmatpush.msra.mxu0 %v75
    %107 = vmatpush.msra.mxu0 %v74
    %108 = vmatpush.msra.mxu0 %v73
    %109 = vmatpush.msra.mxu0 %v72
    %110 = vmatpush.msra.mxu0 %v71
    %111 = vmatpush.msra.mxu0 %v70
    %112 = vmatpush.msra.mxu0 %v69
    %113 = vmatpush.msra.mxu0 %v68
    %114 = vmatpush.msra.mxu0 %v67
    %115 = vmatpush.msra.mxu0 %v66
    %116 = vmatpush.msra.mxu0 %v65
    %117 = vmatpush.msra.mxu0 %v64
    %118 = vmatmul.f32.gmra.mxu0 %v98
    %v119 = vpop.f32.mrf.mxu0
    %v120 = vadd.f32 0.0, %v119
    %121 = vdwg.mxu0
    %122 = vmatpush.msra.mxu0 %v95
    %123 = vmatpush.msra.mxu0 %v94
    %124 = vmatpush.msra.mxu0 %v93
    %125 = vmatpush.msra.mxu0 %v92
    %126 = vmatpush.msra.mxu0 %v91
    %127 = vmatpush.msra.mxu0 %v90
    %128 = vmatpush.msra.mxu0 %v89
    %129 = vmatpush.msra.mxu0 %v88
    %130 = vmatpush.msra.mxu0 %v87
    %131 = vmatpush.msra.mxu0 %v86
    %132 = vmatpush.msra.mxu0 %v85
    %133 = vmatpush.msra.mxu0 %v84
    %134 = vmatpush.msra.mxu0 %v83
    %135 = vmatpush.msra.mxu0 %v82
    %136 = vmatpush.msra.mxu0 %v81
    %137 = vmatpush.msra.mxu0 %v80
    %138 = vmatmul.f32.gmra.mxu0 %v99
    %v139 = vpop.f32.mrf.mxu0
    %v140 = vadd.f32 %v120, %v139
    %141 = vdwg.mxu0
    %v142 = vtanh.pop %v140
    %v143 = vld [vmem:[#allocation3 + $0x100] sm:$0xff]
    %v144 = vld [vmem:[#allocation3 + $0x108] sm:$0xff]
    %v145 = vld [vmem:[#allocation3 + $0x110] sm:$0xff]
    %v146 = vld [vmem:[#allocation3 + $0x118] sm:$0xff]
    %v147 = vld [vmem:[#allocation3 + $0x120] sm:$0xff]
    %v148 = vld [vmem:[#allocation3 + $0x128] sm:$0xff]
    %v149 = vld [vmem:[#allocation3 + $0x130] sm:$0xff]
    %v150 = vld [vmem:[#allocation3 + $0x138] sm:$0xff]
    %v151 = vld [vmem:[#allocation3 + $0x140] sm:$0xff]
    %v152 = vld [vmem:[#allocation3 + $0x148] sm:$0xff]
    %v153 = vld [vmem:[#allocation3 + $0x150] sm:$0xff]
    %v154 = vld [vmem:[#allocation3 + $0x158] sm:$0xff]
    %v155 = vld [vmem:[#allocation3 + $0x160] sm:$0xff]
    %v156 = vld [vmem:[#allocation3 + $0x168] sm:$0xff]
    %v157 = vld [vmem:[#allocation3 + $0x170] sm:$0xff]
    %v158 = vld [vmem:[#allocation3 + $0x178] sm:$0xff]
    %v159 = vld [vmem:[#allocation3 + $0x180] sm:$0x1]
    %160 = vmatpush.msra.mxu0 %v158
    %161 = vmatpush.msra.mxu0 %v157
    %162 = vmatpush.msra.mxu0 %v156
    %163 = vmatpush.msra.mxu0 %v155
    %164 = vmatpush.msra.mxu0 %v154
    %165 = vmatpush.msra.mxu0 %v153
    %166 = vmatpush.msra.mxu0 %v152
    %167 = vmatpush.msra.mxu0 %v151
    %168 = vmatpush.msra.mxu0 %v150
    %169 = vmatpush.msra.mxu0 %v149
    %170 = vmatpush.msra.mxu0 %v148
    %171 = vmatpush.msra.mxu0 %v147
    %172 = vmatpush.msra.mxu0 %v146
    %173 = vmatpush.msra.mxu0 %v145
    %174 = vmatpush.msra.mxu0 %v144
    %175 = vmatpush.msra.mxu0 %v143
    %176 = vmatmul.f32.gmra.mxu0 %v142
    %v177 = vpop.f32.mrf.mxu0
    %v178 = vadd.f32 %v159, %v177
    %179 = vdwg.mxu0
    %vm180 = vcmask 1040384
    %v181 = vsel %vm180, %v178, -inf
    %182 = vmax.xlane.f32.xlu0 %v181
    %v183 = vpop.xlane.xlu0 %182
    %v184 = vsub.f32 %v178, %v183
    %v185 = vmul.f32 %v184, 1.442695
    %v186 = vpow.pop %v185
    %v187 = vsel %vm180, %v186, 0.0
    %188 = vadd.xlane.f32.xlu0 %v187
    %v189 = vpop.xlane.xlu0 %188
    %v190 = vrcp.pop %v189
    %v191 = vmul.f32 %v189, %v190
    %v192 = vsub.f32 1.0, %v191
    %v193 = vmul.f32 %v190, %v192
    %v194 = vadd.f32 %v190, %v193
    %vm195 = vweird.f32 %v189
    %vm196 = vweird.f32 %v190
    %vm197 = vmor %vm195, %vm196
    %v198 = vsel %vm197, %v190, %v194
    %v199 = vand.u32 2147483647, %v189
    %vm200 = vcmp.eq.f32.partialorder %v199, 8.507059e+37
    %v201 = vand.u32 %v189, 2147483648
    %v202 = vor.u32 1.1754944e-38, %v201
    %v203 = vsel %vm200, %v202, %v198
    %v204 = vmul.f32 %v186, %v203
    %205 = vst [vmem:[#allocation8] sm:$0x1] %v204
    %206 = vst.msk [vmem:[#allocation2 + $0x1] sm:$0x1] %vm62, %v142
    %207 = vst [vmem:[#allocation9] sm:$0x1] %v142
    // Predicated region
    $region26: #{tpu_custom_call.1} parent=1 // pred_check
      _
    $region27: #{tpu_custom_call.1} parent=1 // pred_check_branch
      %209 = sbr.rel (0) target = $region29
    $region28: #{tpu_custom_call.1} parent=1 // pred_region
      %211 = vsyncadd [#allocation5], 0
      %s213 = sshll.u32 [#allocation8], 4
      %s214 = int_to_ptr.vmem [resolvable:$true] %s213
      %s215 = sshll.u32 %s3, 4
      %s216 = int_to_ptr.hbm [resolvable:$true] %s215
      %218 = dma.vmem_to_hbm [thread:$0]  %s214, 16, %s216, [#allocation5]
    $region29: #{tpu_custom_call.1} parent=1 // pred_fallthru
      _
    // Predicated region
    $region30: #{tpu_custom_call.1} parent=1 // pred_check
      _
    $region31: #{tpu_custom_call.1} parent=1 // pred_check_branch
      %220 = sbr.rel (0) target = $region33
    $region32: #{tpu_custom_call.1} parent=1 // pred_region
      %222 = vsyncadd [#allocation10], 0
      %s224 = sshll.u32 [#allocation9], 4
      %s225 = int_to_ptr.vmem [resolvable:$true] %s224
      %s226 = sshll.u32 %s4, 4
      %s227 = int_to_ptr.hbm [resolvable:$true] %s226
      %229 = dma.vmem_to_hbm [thread:$0]  %s225, 16, %s227, [#allocation10]
    $region33: #{tpu_custom_call.1} parent=1 // pred_fallthru
      _
    // Predicated region
    $region34: #{tpu_custom_call.1} parent=1 // pred_check
      _
    $region35: #{tpu_custom_call.1} parent=1 // pred_check_branch
      %231 = sbr.rel (0) target = $region37
    $region36: #{tpu_custom_call.1} parent=1 // pred_region
      %233 = dma.done [#allocation5], 16
    $region37: #{tpu_custom_call.1} parent=1 // pred_fallthru
      _
    // Predicated region
    $region38: #{tpu_custom_call.1} parent=1 // pred_check
      _
    $region39: #{tpu_custom_call.1} parent=1 // pred_check_branch
      %235 = sbr.rel (0) target = $region41
    $region40: #{tpu_custom_call.1} parent=1 // pred_region
      %237 = dma.done [#allocation10], 16
    $region41: #{tpu_custom_call.1} parent=1 // pred_fallthru
      _
    %238 = vsyncpa [#allocation4], 1
    %239 = vsyncpa [#allocation7], 1
    %240 = vsyncpa [#allocation5], 1
    %241 = vsyncpa [#allocation10], 1

</llo_original>
